<compile_context>
chip_gen: v7x
topology: tpu7x:2x2x1
jax: 0.10.0
libtpu: 0.0.40
codegen_flags: <defaults>
</compile_context>

<pallas_src>
import functools

import jax
import jax.numpy as jnp
from jax.experimental import pallas as pl
from jax.experimental.pallas import tpu as pltpu


def _round_up(x, m):
    return ((x + m - 1) // m) * m


def _mlp_kernel(x_ref, w1_ref, b1_ref, wh_ref, bh_ref, wo_ref, bo_ref, o_ref,
                *, n_stacked, use_bf16):
    """Whole 7-layer MLP on one batch tile: 6 x (matmul+bias+tanh), 1 x (matmul+bias)."""

    def matmul(a_f32, w_f32):
        if use_bf16:
            # bf16 MXU inputs (v6e/v7x native fast path); accumulate in f32.
            return jnp.dot(a_f32.astype(jnp.bfloat16), w_f32.astype(jnp.bfloat16),
                           preferred_element_type=jnp.float32)
        return jnp.dot(a_f32, w_f32, preferred_element_type=jnp.float32)

    h = x_ref[...].astype(jnp.float32)
    # fc1: obs_dim -> hid_dim
    h = jnp.tanh(matmul(h, w1_ref[...]) + b1_ref[...])
    # fc2..fc6: stacked weights (n_stacked, hid, hid) / biases (n_stacked, 1, hid).
    # Static unroll — tiny fixed depth; static first-axis indexing is free.
    for k in range(n_stacked):
        h = jnp.tanh(matmul(h, wh_ref[k]) + bh_ref[k])
    # fc7: hid_dim -> act_dim, no nonlinearity (bias add + store in f32/out dtype).
    o_ref[...] = (matmul(h, wo_ref[...]) + bo_ref[...]).astype(o_ref.dtype)
    # TODO(synk): if profiling shows the single EUP port saturating on tanh at
    # very large batch tiles, swap in a VPU-friendly rational tanh approximation.


def tep_mlp_deep(x, params, *, batch_tile=256, use_bf16_matmul=False):
    """Run the TEPMLPDEEP forward pass.

    x:      (B, obs_dim) float32
    params: list of 7 (W, b) pairs, W: (in, out), b: (1, out)
            params[0] = fc1, params[1:6] = fc2..fc6 (hid->hid), params[6] = fc7.
    """
    B, obs_dim = x.shape
    act_dim = params[-1][0].shape[1]
    n_stacked = len(params) - 2  # fc2..fc6

    # Tile selection: as big as possible (caps at batch_tile), multiple of 8 for
    # sublane alignment; pad the batch so any tile size works (no divisibility
    # requirement on the caller).
    tile = min(batch_tile, _round_up(B, 8))
    tile = max(8, _round_up(tile, 8))
    B_pad = _round_up(B, tile)
    if B_pad != B:
        x = jnp.pad(x, ((0, B_pad - B), (0, 0)))

    w1, b1 = params[0]
    wo, bo = params[-1]
    # Consolidate the hidden hid->hid layers into two stacked resident operands.
    w_hid = jnp.stack([w for w, _ in params[1:-1]])   # (n_stacked, hid, hid)
    b_hid = jnp.stack([b for _, b in params[1:-1]])   # (n_stacked, 1, hid)

    def full_spec(arr):
        # Whole array, constant block index across the grid -> stays resident.
        return pl.BlockSpec(arr.shape, lambda i, _nd=arr.ndim: (0,) * _nd)

    kernel = functools.partial(_mlp_kernel, n_stacked=n_stacked,
                               use_bf16=use_bf16_matmul)

    out_padded = pl.pallas_call(
        kernel,
        out_shape=jax.ShapeDtypeStruct((B_pad, act_dim), jnp.float32),
        grid_spec=pltpu.PrefetchScalarGridSpec(
            num_scalar_prefetch=0,
            grid=(B_pad // tile,),
            in_specs=[
                pl.BlockSpec((tile, obs_dim), lambda i: (i, 0)),  # x, tiled over batch
                full_spec(w1), full_spec(b1),
                full_spec(w_hid), full_spec(b_hid),
                full_spec(wo), full_spec(bo),
            ],
            out_specs=pl.BlockSpec((tile, act_dim), lambda i: (i, 0)),
        ),
        compiler_params=pltpu.CompilerParams(
            dimension_semantics=("parallel",),  # batch axis shards across TCs (megacore)
        ),
    )(x, w1, b1, w_hid, b_hid, wo, bo)

    return out_padded[:B] if B_pad != B else out_padded


def init_params(key, obs_dim, act_dim, hid_dim):
    """Deterministic xavier_uniform weights (stored transposed: (in, out)) and 0.01 biases."""
    dims = [(obs_dim, hid_dim)] + [(hid_dim, hid_dim)] * 5 + [(hid_dim, act_dim)]
    params = []
    for i, (fan_in, fan_out) in enumerate(dims):
        k = jax.random.fold_in(key, i)
        limit = jnp.sqrt(6.0 / (fan_in + fan_out))
        w = jax.random.uniform(
            k, (fan_in, fan_out), minval=-limit, maxval=limit, dtype=jnp.float32
        )
        b = jnp.full((1, fan_out), 0.01, dtype=jnp.float32)
        params.append((w, b))
    return params


def reference_forward(x, params):
    """Pure-JAX reference matching the PyTorch forward semantics."""
    h = x
    for w, b in params[:-1]:
        h = jnp.tanh(h @ w + b)
    w, b = params[-1]
    return h @ w + b


if __name__ == "__main__":
    # Small shapes consistent with the module: obs_dim -> hid_dim (x6) -> act_dim.
    batch, obs_dim, act_dim, hid_dim = 16, 24, 6, 32

    key = jax.random.PRNGKey(0)
    kx, kp = jax.random.split(key)
    x = jax.random.normal(kx, (batch, obs_dim), dtype=jnp.float32)
    params = init_params(kp, obs_dim, act_dim, hid_dim)

    # 1) f32 path, whole batch in one grid step.
    out = jax.block_until_ready(tep_mlp_deep(x, params))
    ref = reference_forward(x, params)
    assert out.shape == (batch, act_dim)
    assert jnp.allclose(out, ref, atol=1e-5, rtol=1e-5), "Pallas output mismatch vs reference"

    # 2) Non-divisible batch (remainder handled by padding) + multi-step grid.
    x2 = jax.random.normal(jax.random.fold_in(kx, 1), (19, obs_dim), dtype=jnp.float32)
    out2 = jax.block_until_ready(tep_mlp_deep(x2, params, batch_tile=8))
    ref2 = reference_forward(x2, params)
    assert out2.shape == (19, act_dim)
    assert jnp.allclose(out2, ref2, atol=1e-5, rtol=1e-5), "Padded-batch output mismatch"

    # 3) bf16 MXU-input fast path (v6e/v7x); loose tolerance vs f32 reference.
    out3 = jax.block_until_ready(tep_mlp_deep(x, params, use_bf16_matmul=True))
    assert out3.shape == (batch, act_dim)
    assert float(jnp.max(jnp.abs(out3 - ref))) < 0.1, "bf16 path diverged from f32 reference"

    print("KERNEL_OK")
</pallas_src>

<mosaic_0001>
module attributes {stable_mosaic.version = 11 : i64} {
  func.func @_mlp_kernel(%arg0: i32, %arg1: memref<16x24xf32, #tpu.memory_space<vmem>>, %arg2: memref<24x32xf32, #tpu.memory_space<vmem>>, %arg3: memref<1x32xf32, #tpu.memory_space<vmem>>, %arg4: memref<5x32x32xf32, #tpu.memory_space<vmem>>, %arg5: memref<5x1x32xf32, #tpu.memory_space<vmem>>, %arg6: memref<32x6xf32, #tpu.memory_space<vmem>>, %arg7: memref<1x6xf32, #tpu.memory_space<vmem>>, %arg8: memref<16x6xf32, #tpu.memory_space<vmem>>) attributes {dimension_semantics = [#tpu.dimension_semantics<parallel>], iteration_bounds = array<i64: 1>, scalar_prefetch = 0 : i64, scratch_operands = 0 : i64, tpu.core_type = #tpu.core_type<tc>, window_params = [{transform_indices = @transform_0, window_bounds = array<i64: 16, 24>}, {pipeline_mode = #tpu.pipeline_mode<synchronous>, transform_indices = @transform_1, window_bounds = array<i64: 24, 32>}, {pipeline_mode = #tpu.pipeline_mode<synchronous>, transform_indices = @transform_2, window_bounds = array<i64: 1, 32>}, {pipeline_mode = #tpu.pipeline_mode<synchronous>, transform_indices = @transform_3, window_bounds = array<i64: 5, 32, 32>}, {pipeline_mode = #tpu.pipeline_mode<synchronous>, transform_indices = @transform_4, window_bounds = array<i64: 5, 1, 32>}, {pipeline_mode = #tpu.pipeline_mode<synchronous>, transform_indices = @transform_5, window_bounds = array<i64: 32, 6>}, {pipeline_mode = #tpu.pipeline_mode<synchronous>, transform_indices = @transform_6, window_bounds = array<i64: 1, 6>}, {transform_indices = @transform_7, window_bounds = array<i64: 16, 6>}]} {
    %c0 = arith.constant 0 : index
    %c0_0 = arith.constant 0 : index
    %0 = vector.load %arg1[%c0, %c0_0] : memref<16x24xf32, #tpu.memory_space<vmem>>, vector<16x24xf32>
    %c0_1 = arith.constant 0 : index
    %c0_2 = arith.constant 0 : index
    %1 = vector.load %arg2[%c0_1, %c0_2] : memref<24x32xf32, #tpu.memory_space<vmem>>, vector<24x32xf32>
    %cst = arith.constant dense<0.000000e+00> : vector<16x32xf32>
    %2 = tpu.matmul %0, %1, %cst {dimension_numbers = #tpu.dot_dimension_numbers<[1], [0], [0], [1], [0, 0, 1, 1], [], []>} : vector<16x24xf32>, vector<24x32xf32>, vector<16x32xf32> -> vector<16x32xf32>
    %c0_3 = arith.constant 0 : index
    %c0_4 = arith.constant 0 : index
    %3 = vector.load %arg3[%c0_3, %c0_4] : memref<1x32xf32, #tpu.memory_space<vmem>>, vector<1x32xf32>
    %4 = vector.broadcast %3 : vector<1x32xf32> to vector<16x32xf32>
    %5 = arith.addf %2, %4 : vector<16x32xf32>
    %6 = math.tanh %5 : vector<16x32xf32>
    %c0_5 = arith.constant 0 : index
    %c0_6 = arith.constant 0 : index
    %c0_7 = arith.constant 0 : index
    %7 = vector.load %arg4[%c0_5, %c0_6, %c0_7] : memref<5x32x32xf32, #tpu.memory_space<vmem>>, vector<1x32x32xf32>
    %8 = vector.shape_cast %7 : vector<1x32x32xf32> to vector<32x32xf32>
    %cst_8 = arith.constant dense<0.000000e+00> : vector<16x32xf32>
    %9 = tpu.matmul %6, %8, %cst_8 {dimension_numbers = #tpu.dot_dimension_numbers<[1], [0], [0], [1], [0, 0, 1, 1], [], []>} : vector<16x32xf32>, vector<32x32xf32>, vector<16x32xf32> -> vector<16x32xf32>
    %c0_9 = arith.constant 0 : index
    %c0_10 = arith.constant 0 : index
    %c0_11 = arith.constant 0 : index
    %10 = vector.load %arg5[%c0_9, %c0_10, %c0_11] : memref<5x1x32xf32, #tpu.memory_space<vmem>>, vector<1x1x32xf32>
    %11 = vector.shape_cast %10 : vector<1x1x32xf32> to vector<1x32xf32>
    %12 = vector.broadcast %11 : vector<1x32xf32> to vector<16x32xf32>
    %13 = arith.addf %9, %12 : vector<16x32xf32>
    %14 = math.tanh %13 : vector<16x32xf32>
    %c1 = arith.constant 1 : index
    %c0_12 = arith.constant 0 : index
    %c0_13 = arith.constant 0 : index
    %15 = vector.load %arg4[%c1, %c0_12, %c0_13] : memref<5x32x32xf32, #tpu.memory_space<vmem>>, vector<1x32x32xf32>
    %16 = vector.shape_cast %15 : vector<1x32x32xf32> to vector<32x32xf32>
    %cst_14 = arith.constant dense<0.000000e+00> : vector<16x32xf32>
    %17 = tpu.matmul %14, %16, %cst_14 {dimension_numbers = #tpu.dot_dimension_numbers<[1], [0], [0], [1], [0, 0, 1, 1], [], []>} : vector<16x32xf32>, vector<32x32xf32>, vector<16x32xf32> -> vector<16x32xf32>
    %c1_15 = arith.constant 1 : index
    %c0_16 = arith.constant 0 : index
    %c0_17 = arith.constant 0 : index
    %18 = vector.load %arg5[%c1_15, %c0_16, %c0_17] : memref<5x1x32xf32, #tpu.memory_space<vmem>>, vector<1x1x32xf32>
    %19 = vector.shape_cast %18 : vector<1x1x32xf32> to vector<1x32xf32>
    %20 = vector.broadcast %19 : vector<1x32xf32> to vector<16x32xf32>
    %21 = arith.addf %17, %20 : vector<16x32xf32>
    %22 = math.tanh %21 : vector<16x32xf32>
    %c2 = arith.constant 2 : index
    %c0_18 = arith.constant 0 : index
    %c0_19 = arith.constant 0 : index
    %23 = vector.load %arg4[%c2, %c0_18, %c0_19] : memref<5x32x32xf32, #tpu.memory_space<vmem>>, vector<1x32x32xf32>
    %24 = vector.shape_cast %23 : vector<1x32x32xf32> to vector<32x32xf32>
    %cst_20 = arith.constant dense<0.000000e+00> : vector<16x32xf32>
    %25 = tpu.matmul %22, %24, %cst_20 {dimension_numbers = #tpu.dot_dimension_numbers<[1], [0], [0], [1], [0, 0, 1, 1], [], []>} : vector<16x32xf32>, vector<32x32xf32>, vector<16x32xf32> -> vector<16x32xf32>
    %c2_21 = arith.constant 2 : index
    %c0_22 = arith.constant 0 : index
    %c0_23 = arith.constant 0 : index
    %26 = vector.load %arg5[%c2_21, %c0_22, %c0_23] : memref<5x1x32xf32, #tpu.memory_space<vmem>>, vector<1x1x32xf32>
    %27 = vector.shape_cast %26 : vector<1x1x32xf32> to vector<1x32xf32>
    %28 = vector.broadcast %27 : vector<1x32xf32> to vector<16x32xf32>
    %29 = arith.addf %25, %28 : vector<16x32xf32>
    %30 = math.tanh %29 : vector<16x32xf32>
    %c3 = arith.constant 3 : index
    %c0_24 = arith.constant 0 : index
    %c0_25 = arith.constant 0 : index
    %31 = vector.load %arg4[%c3, %c0_24, %c0_25] : memref<5x32x32xf32, #tpu.memory_space<vmem>>, vector<1x32x32xf32>
    %32 = vector.shape_cast %31 : vector<1x32x32xf32> to vector<32x32xf32>
    %cst_26 = arith.constant dense<0.000000e+00> : vector<16x32xf32>
    %33 = tpu.matmul %30, %32, %cst_26 {dimension_numbers = #tpu.dot_dimension_numbers<[1], [0], [0], [1], [0, 0, 1, 1], [], []>} : vector<16x32xf32>, vector<32x32xf32>, vector<16x32xf32> -> vector<16x32xf32>
    %c3_27 = arith.constant 3 : index
    %c0_28 = arith.constant 0 : index
    %c0_29 = arith.constant 0 : index
    %34 = vector.load %arg5[%c3_27, %c0_28, %c0_29] : memref<5x1x32xf32, #tpu.memory_space<vmem>>, vector<1x1x32xf32>
    %35 = vector.shape_cast %34 : vector<1x1x32xf32> to vector<1x32xf32>
    %36 = vector.broadcast %35 : vector<1x32xf32> to vector<16x32xf32>
    %37 = arith.addf %33, %36 : vector<16x32xf32>
    %38 = math.tanh %37 : vector<16x32xf32>
    %c4 = arith.constant 4 : index
    %c0_30 = arith.constant 0 : index
    %c0_31 = arith.constant 0 : index
    %39 = vector.load %arg4[%c4, %c0_30, %c0_31] : memref<5x32x32xf32, #tpu.memory_space<vmem>>, vector<1x32x32xf32>
    %40 = vector.shape_cast %39 : vector<1x32x32xf32> to vector<32x32xf32>
    %cst_32 = arith.constant dense<0.000000e+00> : vector<16x32xf32>
    %41 = tpu.matmul %38, %40, %cst_32 {dimension_numbers = #tpu.dot_dimension_numbers<[1], [0], [0], [1], [0, 0, 1, 1], [], []>} : vector<16x32xf32>, vector<32x32xf32>, vector<16x32xf32> -> vector<16x32xf32>
    %c4_33 = arith.constant 4 : index
    %c0_34 = arith.constant 0 : index
    %c0_35 = arith.constant 0 : index
    %42 = vector.load %arg5[%c4_33, %c0_34, %c0_35] : memref<5x1x32xf32, #tpu.memory_space<vmem>>, vector<1x1x32xf32>
    %43 = vector.shape_cast %42 : vector<1x1x32xf32> to vector<1x32xf32>
    %44 = vector.broadcast %43 : vector<1x32xf32> to vector<16x32xf32>
    %45 = arith.addf %41, %44 : vector<16x32xf32>
    %46 = math.tanh %45 : vector<16x32xf32>
    %c0_36 = arith.constant 0 : index
    %c0_37 = arith.constant 0 : index
    %47 = vector.load %arg6[%c0_36, %c0_37] : memref<32x6xf32, #tpu.memory_space<vmem>>, vector<32x6xf32>
    %cst_38 = arith.constant dense<0.000000e+00> : vector<16x6xf32>
    %48 = tpu.matmul %46, %47, %cst_38 {dimension_numbers = #tpu.dot_dimension_numbers<[1], [0], [0], [1], [0, 0, 1, 1], [], []>} : vector<16x32xf32>, vector<32x6xf32>, vector<16x6xf32> -> vector<16x6xf32>
    %c0_39 = arith.constant 0 : index
    %c0_40 = arith.constant 0 : index
    %49 = vector.load %arg7[%c0_39, %c0_40] : memref<1x6xf32, #tpu.memory_space<vmem>>, vector<1x6xf32>
    %50 = vector.broadcast %49 : vector<1x6xf32> to vector<16x6xf32>
    %51 = arith.addf %48, %50 : vector<16x6xf32>
    %c0_41 = arith.constant 0 : index
    %c0_42 = arith.constant 0 : index
    %52 = vector.load %arg8[%c0_41, %c0_42] : memref<16x6xf32, #tpu.memory_space<vmem>>, vector<16x6xf32>
    tpu.vector_store %arg8[%c0_41, %c0_42], %51 {strides = array<i32>} : memref<16x6xf32, #tpu.memory_space<vmem>>, vector<16x6xf32>,
    return
  }
  func.func @transform_0(%arg0: i32) -> (i32, i32) {
    %c0_i32 = arith.constant 0 : i32
    %c0_i32_0 = arith.constant 0 : i32
    return %arg0, %c0_i32 : i32, i32
  }
  func.func @transform_1(%arg0: i32) -> (i32, i32) {
    %c0_i32 = arith.constant 0 : i32
    %c0_i32_0 = arith.constant 0 : i32
    %c0_i32_1 = arith.constant 0 : i32
    return %c0_i32, %c0_i32_0 : i32, i32
  }
  func.func @transform_2(%arg0: i32) -> (i32, i32) {
    %c0_i32 = arith.constant 0 : i32
    %c0_i32_0 = arith.constant 0 : i32
    %c0_i32_1 = arith.constant 0 : i32
    return %c0_i32, %c0_i32_0 : i32, i32
  }
  func.func @transform_3(%arg0: i32) -> (i32, i32, i32) {
    %c0_i32 = arith.constant 0 : i32
    %c0_i32_0 = arith.constant 0 : i32
    %c0_i32_1 = arith.constant 0 : i32
    %c0_i32_2 = arith.constant 0 : i32
    return %c0_i32, %c0_i32_0, %c0_i32_1 : i32, i32, i32
  }
  func.func @transform_4(%arg0: i32) -> (i32, i32, i32) {
    %c0_i32 = arith.constant 0 : i32
    %c0_i32_0 = arith.constant 0 : i32
    %c0_i32_1 = arith.constant 0 : i32
    %c0_i32_2 = arith.constant 0 : i32
    return %c0_i32, %c0_i32_0, %c0_i32_1 : i32, i32, i32
  }
  func.func @transform_5(%arg0: i32) -> (i32, i32) {
    %c0_i32 = arith.constant 0 : i32
    %c0_i32_0 = arith.constant 0 : i32
    %c0_i32_1 = arith.constant 0 : i32
    return %c0_i32, %c0_i32_0 : i32, i32
  }
  func.func @transform_6(%arg0: i32) -> (i32, i32) {
    %c0_i32 = arith.constant 0 : i32
    %c0_i32_0 = arith.constant 0 : i32
    %c0_i32_1 = arith.constant 0 : i32
    return %c0_i32, %c0_i32_0 : i32, i32
  }
  func.func @transform_7(%arg0: i32) -> (i32, i32) {
    %c0_i32 = arith.constant 0 : i32
    %c0_i32_0 = arith.constant 0 : i32
    return %arg0, %c0_i32 : i32, i32
  }
}

</mosaic_0001>

<llo_original>
// kernel: tpu_custom_call.1
$region0: #{tpu_custom_call.1}
  #allocation0 [shape = 'u32[]', space=smem, size = 0x4, offset = 0x4, fixed_abs, tag = 'smem constant byte address 0x4 - core index']
  #allocation1 [shape = 'u32[144,128]{1,0:T(1,128)}', space=vmem, size = 0x12000, scoped, tag = 'internal scratch']
  %s0 = inlined_call_operand.vmem [shape: f32[16,24], index: 0, kind: input, shape index: {}]
  %s1 = inlined_call_operand.vmem [shape: f32[24,32], index: 1, kind: input, shape index: {}]
  %s2 = inlined_call_operand.vmem [shape: f32[1,32], index: 2, kind: input, shape index: {}]
  %s3 = inlined_call_operand.hbm [shape: f32[5,32,32], index: 3, kind: input, shape index: {}]
  %s4 = inlined_call_operand.vmem [shape: f32[5,1,32], index: 4, kind: input, shape index: {}]
  %s5 = inlined_call_operand.vmem [shape: f32[32,6], index: 5, kind: input, shape index: {}]
  %s6 = inlined_call_operand.vmem [shape: f32[1,6], index: 6, kind: input, shape index: {}]
  %s7 = inlined_call_operand.vmem [shape: f32[16,6], index: 7, kind: output, shape index: {}]
  %s8 = sld [smem:[#allocation0]]
  $region42: #{tpu_custom_call.1} parent=0
    _
  %s10 = ssub.s32 1, %s8
  %s11 = scalar_select 0, %s10, %s8
  $region1: #{tpu_custom_call.1} parent=0
    #allocation2 [shape = 'u8[81920]{0}', space=vmem, size = 0x14000, scoped, tag = 'input window, operand 3, single buffered']
    #allocation3 [shape = 's32[1]{0}', space=sflag, size = 0x4, scoped, tag = 'scoped memory for tpu_custom_call.1']
    %12 = vsyncpa [#allocation3], 0
    // Predicated region
    $region2: #{tpu_custom_call.1} parent=1 // pred_check
      _
    $region3: #{tpu_custom_call.1} parent=1 // pred_check_branch
      %14 = sbr.rel (0) target = $region5
    $region4: #{tpu_custom_call.1} parent=1 // pred_region
      _
    $region5: #{tpu_custom_call.1} parent=1 // pred_fallthru
      _
    // Predicated region
    $region6: #{tpu_custom_call.1} parent=1 // pred_check
      _
    $region7: #{tpu_custom_call.1} parent=1 // pred_check_branch
      %16 = sbr.rel (0) target = $region9
    $region8: #{tpu_custom_call.1} parent=1 // pred_region
      _
    $region9: #{tpu_custom_call.1} parent=1 // pred_fallthru
      _
    // Predicated region
    $region10: #{tpu_custom_call.1} parent=1 // pred_check
      _
    $region11: #{tpu_custom_call.1} parent=1 // pred_check_branch
      %18 = sbr.rel (0) target = $region13
    $region12: #{tpu_custom_call.1} parent=1 // pred_region
      _
    $region13: #{tpu_custom_call.1} parent=1 // pred_fallthru
      _
    // Predicated region
    $region14: #{tpu_custom_call.1} parent=1 // pred_check
      _
    $region15: #{tpu_custom_call.1} parent=1 // pred_check_branch
      %20 = sbr.rel (0) target = $region17
    $region16: #{tpu_custom_call.1} parent=1 // pred_region
      %s22 = ssub.s32 2560, 2560
      %23 = vsyncadd [#allocation3], %s22
      %s24 = sshll.u32 [#allocation2], 4
      %s25 = int_to_ptr.vmem [resolvable:$true] %s24
      %30 = dma.hbm_to_vmem [thread:$0]  %s3, 2560, %s25, [#allocation3], 128, 128, 8
    $region17: #{tpu_custom_call.1} parent=1 // pred_fallthru
      _
    // Predicated region
    $region18: #{tpu_custom_call.1} parent=1 // pred_check
      _
    $region19: #{tpu_custom_call.1} parent=1 // pred_check_branch
      %32 = sbr.rel (0) target = $region21
    $region20: #{tpu_custom_call.1} parent=1 // pred_region
      _
    $region21: #{tpu_custom_call.1} parent=1 // pred_fallthru
      _
    // Predicated region
    $region22: #{tpu_custom_call.1} parent=1 // pred_check
      _
    $region23: #{tpu_custom_call.1} parent=1 // pred_check_branch
      %34 = sbr.rel (0) target = $region25
    $region24: #{tpu_custom_call.1} parent=1 // pred_region
      _
    $region25: #{tpu_custom_call.1} parent=1 // pred_fallthru
      _
    // Predicated region
    $region26: #{tpu_custom_call.1} parent=1 // pred_check
      _
    $region27: #{tpu_custom_call.1} parent=1 // pred_check_branch
      %36 = sbr.rel (0) target = $region29
    $region28: #{tpu_custom_call.1} parent=1 // pred_region
      _
    $region29: #{tpu_custom_call.1} parent=1 // pred_fallthru
      _
    // Predicated region
    $region30: #{tpu_custom_call.1} parent=1 // pred_check
      _
    $region31: #{tpu_custom_call.1} parent=1 // pred_check_branch
      %38 = sbr.rel (0) target = $region33
    $region32: #{tpu_custom_call.1} parent=1 // pred_region
      %39 = dma.done [#allocation3], 2560
    $region33: #{tpu_custom_call.1} parent=1 // pred_fallthru
      _
    %v40 = vld [vmem:[%s0] sm:$0xff]
    %v41 = vld [vmem:[%s0 + $0x8] sm:$0xff]
    %v42 = vld [vmem:[%s1] sm:$0xff]
    %v43 = vld [vmem:[%s1 + $0x8] sm:$0xff]
    %v44 = vld [vmem:[%s1 + $0x10] sm:$0xff]
    %v45 = vld [vmem:[%s2] sm:$0x1]
    %v47 = vlaneseq
    %v48 = vshrl.u32 %v47, 7
    %v49 = vsub.s32 0, %v48
    %v50 = vrot.slane %v45, %v49
    %vm52 = vcmask 195584
    %v54 = vsel %vm52, %v40, 0
    %v57 = vsel %vm52, %v41, 0
    %59 = vmatprep.subr.mxu0 0.0
    %60 = vmatpush1.msra.mxu0 %v42
    %61 = vmatprep.subr.mxu0 0.0
    %62 = vmatpush1.msra.mxu0 %v43
    %63 = vmatprep.subr.mxu0 0.0
    %64 = vmatpush1.msra.mxu0 %v44
    %65 = vmatprep.subr.mxu0 0.0
    %66 = vmatpush1.msra.mxu0 0.0
    %67 = vmatprep.subr.mxu0 0.0
    %68 = vmatpush1.msra.mxu0 0.0
    %69 = vmatprep.subr.mxu0 0.0
    %70 = vmatpush1.msra.mxu0 0.0
    %71 = vmatprep.subr.mxu0 0.0
    %72 = vmatpush1.msra.mxu0 0.0
    %73 = vmatprep.subr.mxu0 0.0
    %74 = vmatpush1.msra.mxu0 0.0
    %75 = vmatprep.subr.mxu0 0.0
    %76 = vmatpush1.msra.mxu0 0.0
    %77 = vmatprep.subr.mxu0 0.0
    %78 = vmatpush1.msra.mxu0 0.0
    %79 = vmatprep.subr.mxu0 0.0
    %80 = vmatpush1.msra.mxu0 0.0
    %81 = vmatprep.subr.mxu0 0.0
    %82 = vmatpush1.msra.mxu0 0.0
    %83 = vmatprep.subr.mxu0 0.0
    %84 = vmatpush1.msra.mxu0 0.0
    %85 = vmatprep.subr.mxu0 0.0
    %86 = vmatpush1.msra.mxu0 0.0
    %87 = vmatprep.subr.mxu0 0.0
    %88 = vmatpush1.msra.mxu0 0.0
    %89 = vmatprep.subr.mxu0 0.0
    %90 = vmatpush1.msra.mxu0 0.0
    %91 = vmatprep.subr.mxu0 0.0
    %92 = vmatpush1.msra.mxu0 0.0
    %93 = vmatprep.subr.mxu0 0.0
    %94 = vmatpush1.msra.mxu0 0.0
    %95 = vmatprep.subr.mxu0 0.0
    %96 = vmatpush1.msra.mxu0 0.0
    %97 = vmatprep.subr.mxu0 0.0
    %98 = vmatpush1.msra.mxu0 0.0
    %99 = vmatprep.subr.mxu0 0.0
    %100 = vmatpush1.msra.mxu0 0.0
    %101 = vmatprep.subr.mxu0 0.0
    %102 = vmatpush1.msra.mxu0 0.0
    %103 = vmatprep.subr.mxu0 0.0
    %104 = vmatpush1.msra.mxu0 0.0
    %105 = vmatprep.subr.mxu0 0.0
    %106 = vmatpush1.msra.mxu0 0.0
    %107 = vmatprep.subr.mxu0 0.0
    %108 = vmatpush1.msra.mxu0 0.0
    %109 = vmatprep.subr.mxu0 0.0
    %110 = vmatpush1.msra.mxu0 0.0
    %111 = vmatprep.subr.mxu0 0.0
    %112 = vmatpush1.msra.mxu0 0.0
    %113 = vmatprep.subr.mxu0 0.0
    %114 = vmatpush1.msra.mxu0 0.0
    %115 = vmatprep.subr.mxu0 0.0
    %116 = vmatpush1.msra.mxu0 0.0
    %117 = vmatprep.subr.mxu0 0.0
    %118 = vmatpush1.msra.mxu0 0.0
    %119 = vmatprep.subr.mxu0 0.0
    %120 = vmatpush1.msra.mxu0 0.0
    %121 = vmatprep.subr.mxu0 0.0
    %122 = vmatpush1.msra.mxu0 0.0
    %123 = vmatprep.mubr.f32.mxu0 0.0
    %124 = vmatmul.mubr.f32.gmra.mrb[0].mxu0 %v54
    %v125 = vpop.f32.mrb[0].mxu0
    %v126 = vadd.f32 %v50, %v125
    %v127 = vpop.f32.mrb[0].mxu0
    %128 = vmatprep.mubr.f32.mxu0 0.0
    %129 = vmatmul.mubr.f32.gmra.mrb[0].mxu0 %v57
    %v130 = vpop.f32.mrb[0].mxu0
    %v131 = vadd.f32 %v50, %v130
    %v132 = vpop.f32.mrb[0].mxu0
    %133 = vdwg.mxu0
    %v134 = vtanh.pop %v126
    %v135 = vtanh.pop %v131
    %v136 = vld [vmem:[#allocation2] sm:$0xff]
    %v137 = vld [vmem:[#allocation2 + $0x8] sm:$0xff]
    %v138 = vld [vmem:[#allocation2 + $0x10] sm:$0xff]
    %v139 = vld [vmem:[#allocation2 + $0x18] sm:$0xff]
    %v140 = vld [vmem:[%s4] sm:$0x1]
    %v142 = vlaneseq
    %v143 = vshrl.u32 %v142, 7
    %v144 = vsub.s32 0, %v143
    %v145 = vrot.slane %v140, %v144
    %vm147 = vcmask 261120
    %v149 = vsel %vm147, %v134, 0
    %v152 = vsel %vm147, %v135, 0
    %154 = vmatprep.subr.mxu0 0.0
    %155 = vmatpush1.msra.mxu0 %v136
    %156 = vmatprep.subr.mxu0 0.0
    %157 = vmatpush1.msra.mxu0 %v137
    %158 = vmatprep.subr.mxu0 0.0
    %159 = vmatpush1.msra.mxu0 %v138
    %160 = vmatprep.subr.mxu0 0.0
    %161 = vmatpush1.msra.mxu0 %v139
    %162 = vmatprep.subr.mxu0 0.0
    %163 = vmatpush1.msra.mxu0 0.0
    %164 = vmatprep.subr.mxu0 0.0
    %165 = vmatpush1.msra.mxu0 0.0
    %166 = vmatprep.subr.mxu0 0.0
    %167 = vmatpush1.msra.mxu0 0.0
    %168 = vmatprep.subr.mxu0 0.0
    %169 = vmatpush1.msra.mxu0 0.0
    %170 = vmatprep.subr.mxu0 0.0
    %171 = vmatpush1.msra.mxu0 0.0
    %172 = vmatprep.subr.mxu0 0.0
    %173 = vmatpush1.msra.mxu0 0.0
    %174 = vmatprep.subr.mxu0 0.0
    %175 = vmatpush1.msra.mxu0 0.0
    %176 = vmatprep.subr.mxu0 0.0
    %177 = vmatpush1.msra.mxu0 0.0
    %178 = vmatprep.subr.mxu0 0.0
    %179 = vmatpush1.msra.mxu0 0.0
    %180 = vmatprep.subr.mxu0 0.0
    %181 = vmatpush1.msra.mxu0 0.0
    %182 = vmatprep.subr.mxu0 0.0
    %183 = vmatpush1.msra.mxu0 0.0
    %184 = vmatprep.subr.mxu0 0.0
    %185 = vmatpush1.msra.mxu0 0.0
    %186 = vmatprep.subr.mxu0 0.0
    %187 = vmatpush1.msra.mxu0 0.0
    %188 = vmatprep.subr.mxu0 0.0
    %189 = vmatpush1.msra.mxu0 0.0
    %190 = vmatprep.subr.mxu0 0.0
    %191 = vmatpush1.msra.mxu0 0.0
    %192 = vmatprep.subr.mxu0 0.0
    %193 = vmatpush1.msra.mxu0 0.0
    %194 = vmatprep.subr.mxu0 0.0
    %195 = vmatpush1.msra.mxu0 0.0
    %196 = vmatprep.subr.mxu0 0.0
    %197 = vmatpush1.msra.mxu0 0.0
    %198 = vmatprep.subr.mxu0 0.0
    %199 = vmatpush1.msra.mxu0 0.0
    %200 = vmatprep.subr.mxu0 0.0
    %201 = vmatpush1.msra.mxu0 0.0
    %202 = vmatprep.subr.mxu0 0.0
    %203 = vmatpush1.msra.mxu0 0.0
    %204 = vmatprep.subr.mxu0 0.0
    %205 = vmatpush1.msra.mxu0 0.0
    %206 = vmatprep.subr.mxu0 0.0
    %207 = vmatpush1.msra.mxu0 0.0
    %208 = vmatprep.subr.mxu0 0.0
    %209 = vmatpush1.msra.mxu0 0.0
    %210 = vmatprep.subr.mxu0 0.0
    %211 = vmatpush1.msra.mxu0 0.0
    %212 = vmatprep.subr.mxu0 0.0
    %213 = vmatpush1.msra.mxu0 0.0
    %214 = vmatprep.subr.mxu0 0.0
    %215 = vmatpush1.msra.mxu0 0.0
    %216 = vmatprep.subr.mxu0 0.0
    %217 = vmatpush1.msra.mxu0 0.0
    %218 = vmatprep.mubr.f32.mxu0 0.0
    %219 = vmatmul.mubr.f32.gmra.mrb[0].mxu0 %v149
    %v220 = vpop.f32.mrb[0].mxu0
    %v221 = vadd.f32 %v145, %v220
    %v222 = vpop.f32.mrb[0].mxu0
    %223 = vmatprep.mubr.f32.mxu0 0.0
    %224 = vmatmul.mubr.f32.gmra.mrb[0].mxu0 %v152
    %v225 = vpop.f32.mrb[0].mxu0
    %v226 = vadd.f32 %v145, %v225
    %v227 = vpop.f32.mrb[0].mxu0
    %228 = vdwg.mxu0
    %v229 = vtanh.pop %v221
    %v230 = vtanh.pop %v226
    %s231 = scalar_lea.vmem [#allocation2], 32
    %v232 = vld [vmem:[%s231] sm:$0xff]
    %v233 = vld [vmem:[%s231 + $0x8] sm:$0xff]
    %v234 = vld [vmem:[%s231 + $0x10] sm:$0xff]
    %v235 = vld [vmem:[%s231 + $0x18] sm:$0xff]
    %s236 = scalar_lea.vmem %s4, 1
    %v237 = vld [vmem:[%s236] sm:$0x1]
    %v239 = vlaneseq
    %v240 = vshrl.u32 %v239, 7
    %v241 = vsub.s32 0, %v240
    %v242 = vrot.slane %v237, %v241
    %v245 = vsel %vm147, %v229, 0
    %v248 = vsel %vm147, %v230, 0
    %250 = vmatprep.subr.mxu0 0.0
    %251 = vmatpush1.msra.mxu0 %v232
    %252 = vmatprep.subr.mxu0 0.0
    %253 = vmatpush1.msra.mxu0 %v233
    %254 = vmatprep.subr.mxu0 0.0
    %255 = vmatpush1.msra.mxu0 %v234
    %256 = vmatprep.subr.mxu0 0.0
    %257 = vmatpush1.msra.mxu0 %v235
    %258 = vmatprep.subr.mxu0 0.0
    %259 = vmatpush1.msra.mxu0 0.0
    %260 = vmatprep.subr.mxu0 0.0
    %261 = vmatpush1.msra.mxu0 0.0
    %262 = vmatprep.subr.mxu0 0.0
    %263 = vmatpush1.msra.mxu0 0.0
    %264 = vmatprep.subr.mxu0 0.0
    %265 = vmatpush1.msra.mxu0 0.0
    %266 = vmatprep.subr.mxu0 0.0
    %267 = vmatpush1.msra.mxu0 0.0
    %268 = vmatprep.subr.mxu0 0.0
    %269 = vmatpush1.msra.mxu0 0.0
    %270 = vmatprep.subr.mxu0 0.0
    %271 = vmatpush1.msra.mxu0 0.0
    %272 = vmatprep.subr.mxu0 0.0
    %273 = vmatpush1.msra.mxu0 0.0
    %274 = vmatprep.subr.mxu0 0.0
    %275 = vmatpush1.msra.mxu0 0.0
    %276 = vmatprep.subr.mxu0 0.0
    %277 = vmatpush1.msra.mxu0 0.0
    %278 = vmatprep.subr.mxu0 0.0
    %279 = vmatpush1.msra.mxu0 0.0
    %280 = vmatprep.subr.mxu0 0.0
    %281 = vmatpush1.msra.mxu0 0.0
    %282 = vmatprep.subr.mxu0 0.0
    %283 = vmatpush1.msra.mxu0 0.0
    %284 = vmatprep.subr.mxu0 0.0
    %285 = vmatpush1.msra.mxu0 0.0
    %286 = vmatprep.subr.mxu0 0.0
    %287 = vmatpush1.msra.mxu0 0.0
    %288 = vmatprep.subr.mxu0 0.0
    %289 = vmatpush1.msra.mxu0 0.0
    %290 = vmatprep.subr.mxu0 0.0
    %291 = vmatpush1.msra.mxu0 0.0
    %292 = vmatprep.subr.mxu0 0.0
    %293 = vmatpush1.msra.mxu0 0.0
    %294 = vmatprep.subr.mxu0 0.0
    %295 = vmatpush1.msra.mxu0 0.0
    %296 = vmatprep.subr.mxu0 0.0
    %297 = vmatpush1.msra.mxu0 0.0
    %298 = vmatprep.subr.mxu0 0.0
    %299 = vmatpush1.msra.mxu0 0.0
    %300 = vmatprep.subr.mxu0 0.0
    %301 = vmatpush1.msra.mxu0 0.0
    %302 = vmatprep.subr.mxu0 0.0
    %303 = vmatpush1.msra.mxu0 0.0
    %304 = vmatprep.subr.mxu0 0.0
    %305 = vmatpush1.msra.mxu0 0.0
    %306 = vmatprep.subr.mxu0 0.0
    %307 = vmatpush1.msra.mxu0 0.0
    %308 = vmatprep.subr.mxu0 0.0
    %309 = vmatpush1.msra.mxu0 0.0
    %310 = vmatprep.subr.mxu0 0.0
    %311 = vmatpush1.msra.mxu0 0.0
    %312 = vmatprep.subr.mxu0 0.0
    %313 = vmatpush1.msra.mxu0 0.0
    %314 = vmatprep.mubr.f32.mxu0 0.0
    %315 = vmatmul.mubr.f32.gmra.mrb[0].mxu0 %v245
    %v316 = vpop.f32.mrb[0].mxu0
    %v317 = vadd.f32 %v242, %v316
    %v318 = vpop.f32.mrb[0].mxu0
    %319 = vmatprep.mubr.f32.mxu0 0.0
    %320 = vmatmul.mubr.f32.gmra.mrb[0].mxu0 %v248
    %v321 = vpop.f32.mrb[0].mxu0
    %v322 = vadd.f32 %v242, %v321
    %v323 = vpop.f32.mrb[0].mxu0
    %324 = vdwg.mxu0
    %v325 = vtanh.pop %v317
    %v326 = vtanh.pop %v322
    %s327 = scalar_lea.vmem [#allocation2], 64
    %v328 = vld [vmem:[%s327] sm:$0xff]
    %v329 = vld [vmem:[%s327 + $0x8] sm:$0xff]
    %v330 = vld [vmem:[%s327 + $0x10] sm:$0xff]
    %v331 = vld [vmem:[%s327 + $0x18] sm:$0xff]
    %s332 = scalar_lea.vmem %s4, 2
    %v333 = vld [vmem:[%s332] sm:$0x1]
    %v335 = vlaneseq
    %v336 = vshrl.u32 %v335, 7
    %v337 = vsub.s32 0, %v336
    %v338 = vrot.slane %v333, %v337
    %v341 = vsel %vm147, %v325, 0
    %v344 = vsel %vm147, %v326, 0
    %346 = vmatprep.subr.mxu0 0.0
    %347 = vmatpush1.msra.mxu0 %v328
    %348 = vmatprep.subr.mxu0 0.0
    %349 = vmatpush1.msra.mxu0 %v329
    %350 = vmatprep.subr.mxu0 0.0
    %351 = vmatpush1.msra.mxu0 %v330
    %352 = vmatprep.subr.mxu0 0.0
    %353 = vmatpush1.msra.mxu0 %v331
    %354 = vmatprep.subr.mxu0 0.0
    %355 = vmatpush1.msra.mxu0 0.0
    %356 = vmatprep.subr.mxu0 0.0
    %357 = vmatpush1.msra.mxu0 0.0
    %358 = vmatprep.subr.mxu0 0.0
    %359 = vmatpush1.msra.mxu0 0.0
    %360 = vmatprep.subr.mxu0 0.0
    %361 = vmatpush1.msra.mxu0 0.0
    %362 = vmatprep.subr.mxu0 0.0
    %363 = vmatpush1.msra.mxu0 0.0
    %364 = vmatprep.subr.mxu0 0.0
    %365 = vmatpush1.msra.mxu0 0.0
    %366 = vmatprep.subr.mxu0 0.0
    %367 = vmatpush1.msra.mxu0 0.0
    %368 = vmatprep.subr.mxu0 0.0
    %369 = vmatpush1.msra.mxu0 0.0
    %370 = vmatprep.subr.mxu0 0.0
    %371 = vmatpush1.msra.mxu0 0.0
    %372 = vmatprep.subr.mxu0 0.0
    %373 = vmatpush1.msra.mxu0 0.0
    %374 = vmatprep.subr.mxu0 0.0
    %375 = vmatpush1.msra.mxu0 0.0
    %376 = vmatprep.subr.mxu0 0.0
    %377 = vmatpush1.msra.mxu0 0.0
    %378 = vmatprep.subr.mxu0 0.0
    %379 = vmatpush1.msra.mxu0 0.0
    %380 = vmatprep.subr.mxu0 0.0
    %381 = vmatpush1.msra.mxu0 0.0
    %382 = vmatprep.subr.mxu0 0.0
    %383 = vmatpush1.msra.mxu0 0.0
    %384 = vmatprep.subr.mxu0 0.0
    %385 = vmatpush1.msra.mxu0 0.0
    %386 = vmatprep.subr.mxu0 0.0
    %387 = vmatpush1.msra.mxu0 0.0
    %388 = vmatprep.subr.mxu0 0.0
    %389 = vmatpush1.msra.mxu0 0.0
    %390 = vmatprep.subr.mxu0 0.0
    %391 = vmatpush1.msra.mxu0 0.0
    %392 = vmatprep.subr.mxu0 0.0
    %393 = vmatpush1.msra.mxu0 0.0
    %394 = vmatprep.subr.mxu0 0.0
    %395 = vmatpush1.msra.mxu0 0.0
    %396 = vmatprep.subr.mxu0 0.0
    %397 = vmatpush1.msra.mxu0 0.0
    %398 = vmatprep.subr.mxu0 0.0
    %399 = vmatpush1.msra.mxu0 0.0
    %400 = vmatprep.subr.mxu0 0.0
    %401 = vmatpush1.msra.mxu0 0.0
    %402 = vmatprep.subr.mxu0 0.0
    %403 = vmatpush1.msra.mxu0 0.0
    %404 = vmatprep.subr.mxu0 0.0
    %405 = vmatpush1.msra.mxu0 0.0
    %406 = vmatprep.subr.mxu0 0.0
    %407 = vmatpush1.msra.mxu0 0.0
    %408 = vmatprep.subr.mxu0 0.0
    %409 = vmatpush1.msra.mxu0 0.0
    %410 = vmatprep.mubr.f32.mxu0 0.0
    %411 = vmatmul.mubr.f32.gmra.mrb[0].mxu0 %v341
    %v412 = vpop.f32.mrb[0].mxu0
    %v413 = vadd.f32 %v338, %v412
    %v414 = vpop.f32.mrb[0].mxu0
    %415 = vmatprep.mubr.f32.mxu0 0.0
    %416 = vmatmul.mubr.f32.gmra.mrb[0].mxu0 %v344
    %v417 = vpop.f32.mrb[0].mxu0
    %v418 = vadd.f32 %v338, %v417
    %v419 = vpop.f32.mrb[0].mxu0
    %420 = vdwg.mxu0
    %v421 = vtanh.pop %v413
    %v422 = vtanh.pop %v418
    %s423 = scalar_lea.vmem [#allocation2], 96
    %v424 = vld [vmem:[%s423] sm:$0xff]
    %v425 = vld [vmem:[%s423 + $0x8] sm:$0xff]
    %v426 = vld [vmem:[%s423 + $0x10] sm:$0xff]
    %v427 = vld [vmem:[%s423 + $0x18] sm:$0xff]
    %s428 = scalar_lea.vmem %s4, 3
    %v429 = vld [vmem:[%s428] sm:$0x1]
    %v431 = vlaneseq
    %v432 = vshrl.u32 %v431, 7
    %v433 = vsub.s32 0, %v432
    %v434 = vrot.slane %v429, %v433
    %v437 = vsel %vm147, %v421, 0
    %v440 = vsel %vm147, %v422, 0
    %442 = vmatprep.subr.mxu0 0.0
    %443 = vmatpush1.msra.mxu0 %v424
    %444 = vmatprep.subr.mxu0 0.0
    %445 = vmatpush1.msra.mxu0 %v425
    %446 = vmatprep.subr.mxu0 0.0
    %447 = vmatpush1.msra.mxu0 %v426
    %448 = vmatprep.subr.mxu0 0.0
    %449 = vmatpush1.msra.mxu0 %v427
    %450 = vmatprep.subr.mxu0 0.0
    %451 = vmatpush1.msra.mxu0 0.0
    %452 = vmatprep.subr.mxu0 0.0
    %453 = vmatpush1.msra.mxu0 0.0
    %454 = vmatprep.subr.mxu0 0.0
    %455 = vmatpush1.msra.mxu0 0.0
    %456 = vmatprep.subr.mxu0 0.0
    %457 = vmatpush1.msra.mxu0 0.0
    %458 = vmatprep.subr.mxu0 0.0
    %459 = vmatpush1.msra.mxu0 0.0
    %460 = vmatprep.subr.mxu0 0.0
    %461 = vmatpush1.msra.mxu0 0.0
    %462 = vmatprep.subr.mxu0 0.0
    %463 = vmatpush1.msra.mxu0 0.0
    %464 = vmatprep.subr.mxu0 0.0
    %465 = vmatpush1.msra.mxu0 0.0
    %466 = vmatprep.subr.mxu0 0.0
    %467 = vmatpush1.msra.mxu0 0.0
    %468 = vmatprep.subr.mxu0 0.0
    %469 = vmatpush1.msra.mxu0 0.0
    %470 = vmatprep.subr.mxu0 0.0
    %471 = vmatpush1.msra.mxu0 0.0
    %472 = vmatprep.subr.mxu0 0.0
    %473 = vmatpush1.msra.mxu0 0.0
    %474 = vmatprep.subr.mxu0 0.0
    %475 = vmatpush1.msra.mxu0 0.0
    %476 = vmatprep.subr.mxu0 0.0
    %477 = vmatpush1.msra.mxu0 0.0
    %478 = vmatprep.subr.mxu0 0.0
    %479 = vmatpush1.msra.mxu0 0.0
    %480 = vmatprep.subr.mxu0 0.0
    %481 = vmatpush1.msra.mxu0 0.0
    %482 = vmatprep.subr.mxu0 0.0
    %483 = vmatpush1.msra.mxu0 0.0
    %484 = vmatprep.subr.mxu0 0.0
    %485 = vmatpush1.msra.mxu0 0.0
    %486 = vmatprep.subr.mxu0 0.0
    %487 = vmatpush1.msra.mxu0 0.0
    %488 = vmatprep.subr.mxu0 0.0
    %489 = vmatpush1.msra.mxu0 0.0
    %490 = vmatprep.subr.mxu0 0.0
    %491 = vmatpush1.msra.mxu0 0.0
    %492 = vmatprep.subr.mxu0 0.0
    %493 = vmatpush1.msra.mxu0 0.0
    %494 = vmatprep.subr.mxu0 0.0
    %495 = vmatpush1.msra.mxu0 0.0
    %496 = vmatprep.subr.mxu0 0.0
    %497 = vmatpush1.msra.mxu0 0.0
    %498 = vmatprep.subr.mxu0 0.0
    %499 = vmatpush1.msra.mxu0 0.0
    %500 = vmatprep.subr.mxu0 0.0
    %501 = vmatpush1.msra.mxu0 0.0
    %502 = vmatprep.subr.mxu0 0.0
    %503 = vmatpush1.msra.mxu0 0.0
    %504 = vmatprep.subr.mxu0 0.0
    %505 = vmatpush1.msra.mxu0 0.0
    %506 = vmatprep.mubr.f32.mxu0 0.0
    %507 = vmatmul.mubr.f32.gmra.mrb[0].mxu0 %v437
    %v508 = vpop.f32.mrb[0].mxu0
    %v509 = vadd.f32 %v434, %v508
    %v510 = vpop.f32.mrb[0].mxu0
    %511 = vmatprep.mubr.f32.mxu0 0.0
    %512 = vmatmul.mubr.f32.gmra.mrb[0].mxu0 %v440
    %v513 = vpop.f32.mrb[0].mxu0
    %v514 = vadd.f32 %v434, %v513
    %v515 = vpop.f32.mrb[0].mxu0
    %516 = vdwg.mxu0
    %v517 = vtanh.pop %v509
    %v518 = vtanh.pop %v514
    %s519 = scalar_lea.vmem [#allocation2], 128
    %v520 = vld [vmem:[%s519] sm:$0xff]
    %v521 = vld [vmem:[%s519 + $0x8] sm:$0xff]
    %v522 = vld [vmem:[%s519 + $0x10] sm:$0xff]
    %v523 = vld [vmem:[%s519 + $0x18] sm:$0xff]
    %s524 = scalar_lea.vmem %s4, 4
    %v525 = vld [vmem:[%s524] sm:$0x1]
    %v527 = vlaneseq
    %v528 = vshrl.u32 %v527, 7
    %v529 = vsub.s32 0, %v528
    %v530 = vrot.slane %v525, %v529
    %v533 = vsel %vm147, %v517, 0
    %v536 = vsel %vm147, %v518, 0
    %538 = vmatprep.subr.mxu0 0.0
    %539 = vmatpush1.msra.mxu0 %v520
    %540 = vmatprep.subr.mxu0 0.0
    %541 = vmatpush1.msra.mxu0 %v521
    %542 = vmatprep.subr.mxu0 0.0
    %543 = vmatpush1.msra.mxu0 %v522
    %544 = vmatprep.subr.mxu0 0.0
    %545 = vmatpush1.msra.mxu0 %v523
    %546 = vmatprep.subr.mxu0 0.0
    %547 = vmatpush1.msra.mxu0 0.0
    %548 = vmatprep.subr.mxu0 0.0
    %549 = vmatpush1.msra.mxu0 0.0
    %550 = vmatprep.subr.mxu0 0.0
    %551 = vmatpush1.msra.mxu0 0.0
    %552 = vmatprep.subr.mxu0 0.0
    %553 = vmatpush1.msra.mxu0 0.0
    %554 = vmatprep.subr.mxu0 0.0
    %555 = vmatpush1.msra.mxu0 0.0
    %556 = vmatprep.subr.mxu0 0.0
    %557 = vmatpush1.msra.mxu0 0.0
    %558 = vmatprep.subr.mxu0 0.0
    %559 = vmatpush1.msra.mxu0 0.0
    %560 = vmatprep.subr.mxu0 0.0
    %561 = vmatpush1.msra.mxu0 0.0
    %562 = vmatprep.subr.mxu0 0.0
    %563 = vmatpush1.msra.mxu0 0.0
    %564 = vmatprep.subr.mxu0 0.0
    %565 = vmatpush1.msra.mxu0 0.0
    %566 = vmatprep.subr.mxu0 0.0
    %567 = vmatpush1.msra.mxu0 0.0
    %568 = vmatprep.subr.mxu0 0.0
    %569 = vmatpush1.msra.mxu0 0.0
    %570 = vmatprep.subr.mxu0 0.0
    %571 = vmatpush1.msra.mxu0 0.0
    %572 = vmatprep.subr.mxu0 0.0
    %573 = vmatpush1.msra.mxu0 0.0
    %574 = vmatprep.subr.mxu0 0.0
    %575 = vmatpush1.msra.mxu0 0.0
    %576 = vmatprep.subr.mxu0 0.0
    %577 = vmatpush1.msra.mxu0 0.0
    %578 = vmatprep.subr.mxu0 0.0
    %579 = vmatpush1.msra.mxu0 0.0
    %580 = vmatprep.subr.mxu0 0.0
    %581 = vmatpush1.msra.mxu0 0.0
    %582 = vmatprep.subr.mxu0 0.0
    %583 = vmatpush1.msra.mxu0 0.0
    %584 = vmatprep.subr.mxu0 0.0
    %585 = vmatpush1.msra.mxu0 0.0
    %586 = vmatprep.subr.mxu0 0.0
    %587 = vmatpush1.msra.mxu0 0.0
    %588 = vmatprep.subr.mxu0 0.0
    %589 = vmatpush1.msra.mxu0 0.0
    %590 = vmatprep.subr.mxu0 0.0
    %591 = vmatpush1.msra.mxu0 0.0
    %592 = vmatprep.subr.mxu0 0.0
    %593 = vmatpush1.msra.mxu0 0.0
    %594 = vmatprep.subr.mxu0 0.0
    %595 = vmatpush1.msra.mxu0 0.0
    %596 = vmatprep.subr.mxu0 0.0
    %597 = vmatpush1.msra.mxu0 0.0
    %598 = vmatprep.subr.mxu0 0.0
    %599 = vmatpush1.msra.mxu0 0.0
    %600 = vmatprep.subr.mxu0 0.0
    %601 = vmatpush1.msra.mxu0 0.0
    %602 = vmatprep.mubr.f32.mxu0 0.0
    %603 = vmatmul.mubr.f32.gmra.mrb[0].mxu0 %v533
    %v604 = vpop.f32.mrb[0].mxu0
    %v605 = vadd.f32 %v530, %v604
    %v606 = vpop.f32.mrb[0].mxu0
    %607 = vmatprep.mubr.f32.mxu0 0.0
    %608 = vmatmul.mubr.f32.gmra.mrb[0].mxu0 %v536
    %v609 = vpop.f32.mrb[0].mxu0
    %v610 = vadd.f32 %v530, %v609
    %v611 = vpop.f32.mrb[0].mxu0
    %612 = vdwg.mxu0
    %v613 = vtanh.pop %v605
    %v614 = vtanh.pop %v610
    %v615 = vld [vmem:[%s5] sm:$0xff]
    %v616 = vld [vmem:[%s5 + $0x8] sm:$0xff]
    %v617 = vld [vmem:[%s5 + $0x10] sm:$0xff]
    %v618 = vld [vmem:[%s5 + $0x18] sm:$0xff]
    %v619 = vld [vmem:[%s6] sm:$0x1]
    %v621 = vlaneseq
    %v622 = vshrl.u32 %v621, 7
    %v623 = vsub.s32 0, %v622
    %v624 = vrot.slane %v619, %v623
    %v627 = vsel %vm147, %v613, 0
    %v630 = vsel %vm147, %v614, 0
    %632 = vmatprep.subr.mxu0 0.0
    %633 = vmatpush1.msra.mxu0 %v615
    %634 = vmatprep.subr.mxu0 0.0
    %635 = vmatpush1.msra.mxu0 %v616
    %636 = vmatprep.subr.mxu0 0.0
    %637 = vmatpush1.msra.mxu0 %v617
    %638 = vmatprep.subr.mxu0 0.0
    %639 = vmatpush1.msra.mxu0 %v618
    %640 = vmatprep.subr.mxu0 0.0
    %641 = vmatpush1.msra.mxu0 0.0
    %642 = vmatprep.subr.mxu0 0.0
    %643 = vmatpush1.msra.mxu0 0.0
    %644 = vmatprep.subr.mxu0 0.0
    %645 = vmatpush1.msra.mxu0 0.0
    %646 = vmatprep.subr.mxu0 0.0
    %647 = vmatpush1.msra.mxu0 0.0
    %648 = vmatprep.subr.mxu0 0.0
    %649 = vmatpush1.msra.mxu0 0.0
    %650 = vmatprep.subr.mxu0 0.0
    %651 = vmatpush1.msra.mxu0 0.0
    %652 = vmatprep.subr.mxu0 0.0
    %653 = vmatpush1.msra.mxu0 0.0
    %654 = vmatprep.subr.mxu0 0.0
    %655 = vmatpush1.msra.mxu0 0.0
    %656 = vmatprep.subr.mxu0 0.0
    %657 = vmatpush1.msra.mxu0 0.0
    %658 = vmatprep.subr.mxu0 0.0
    %659 = vmatpush1.msra.mxu0 0.0
    %660 = vmatprep.subr.mxu0 0.0
    %661 = vmatpush1.msra.mxu0 0.0
    %662 = vmatprep.subr.mxu0 0.0
    %663 = vmatpush1.msra.mxu0 0.0
    %664 = vmatprep.subr.mxu0 0.0
    %665 = vmatpush1.msra.mxu0 0.0
    %666 = vmatprep.subr.mxu0 0.0
    %667 = vmatpush1.msra.mxu0 0.0
    %668 = vmatprep.subr.mxu0 0.0
    %669 = vmatpush1.msra.mxu0 0.0
    %670 = vmatprep.subr.mxu0 0.0
    %671 = vmatpush1.msra.mxu0 0.0
    %672 = vmatprep.subr.mxu0 0.0
    %673 = vmatpush1.msra.mxu0 0.0
    %674 = vmatprep.subr.mxu0 0.0
    %675 = vmatpush1.msra.mxu0 0.0
    %676 = vmatprep.subr.mxu0 0.0
    %677 = vmatpush1.msra.mxu0 0.0
    %678 = vmatprep.subr.mxu0 0.0
    %679 = vmatpush1.msra.mxu0 0.0
    %680 = vmatprep.subr.mxu0 0.0
    %681 = vmatpush1.msra.mxu0 0.0
    %682 = vmatprep.subr.mxu0 0.0
    %683 = vmatpush1.msra.mxu0 0.0
    %684 = vmatprep.subr.mxu0 0.0
    %685 = vmatpush1.msra.mxu0 0.0
    %686 = vmatprep.subr.mxu0 0.0
    %687 = vmatpush1.msra.mxu0 0.0
    %688 = vmatprep.subr.mxu0 0.0
    %689 = vmatpush1.msra.mxu0 0.0
    %690 = vmatprep.subr.mxu0 0.0
    %691 = vmatpush1.msra.mxu0 0.0
    %692 = vmatprep.subr.mxu0 0.0
    %693 = vmatpush1.msra.mxu0 0.0
    %694 = vmatprep.subr.mxu0 0.0
    %695 = vmatpush1.msra.mxu0 0.0
    %696 = vmatprep.mubr.f32.mxu0 0.0
    %697 = vmatmul.mubr.f32.gmra.mrb[0].mxu0 %v627
    %v698 = vpop.f32.mrb[0].mxu0
    %v699 = vadd.f32 %v624, %v698
    %v700 = vpop.f32.mrb[0].mxu0
    %701 = vmatprep.mubr.f32.mxu0 0.0
    %702 = vmatmul.mubr.f32.gmra.mrb[0].mxu0 %v630
    %v703 = vpop.f32.mrb[0].mxu0
    %v704 = vadd.f32 %v624, %v703
    %v705 = vpop.f32.mrb[0].mxu0
    %706 = vdwg.mxu0
    %vm707 = vcmask 48128
    %708 = vst.msk [vmem:[%s7] sm:$0xff] %vm707, %v699
    %709 = vst.msk [vmem:[%s7 + $0x8] sm:$0xff] %vm707, %v704
    // Predicated region
    $region34: #{tpu_custom_call.1} parent=1 // pred_check
      _
    $region35: #{tpu_custom_call.1} parent=1 // pred_check_branch
      %711 = sbr.rel (0) target = $region37
    $region36: #{tpu_custom_call.1} parent=1 // pred_region
      _
    $region37: #{tpu_custom_call.1} parent=1 // pred_fallthru
      _
    // Predicated region
    $region38: #{tpu_custom_call.1} parent=1 // pred_check
      _
    $region39: #{tpu_custom_call.1} parent=1 // pred_check_branch
      %713 = sbr.rel (0) target = $region41
    $region40: #{tpu_custom_call.1} parent=1 // pred_region
      _
    $region41: #{tpu_custom_call.1} parent=1 // pred_fallthru
      _
    %714 = vsyncpa [#allocation3], 1

</llo_original>
